<compile_context>
chip_gen: v7x
topology: tpu7x:2x2x1
jax: 0.10.0
libtpu: 0.0.40
codegen_flags: <defaults>
</compile_context>

<pallas_src>
from functools import partial

import jax
import jax.numpy as jnp
from jax.experimental import pallas as pl
from jax.experimental.pallas import tpu as pltpu


def _round_up(x, m):
    return ((x + m - 1) // m) * m


# ----------------------------------------------------------------------------
# Kernel 1 (prologue): per-relation projection  HW[r] = H @ W[r]
# ----------------------------------------------------------------------------
def _hw_kernel(h_ref, w_ref, hw_ref):
    # h_ref : (TMH, Fin)        bf16 node-feature row tile
    # w_ref : (1, Fin, F_pad)   bf16 weight for relation r
    # hw_ref: (1, TMH, F_pad)   bf16 projected features
    hw_ref[0] = jnp.dot(
        h_ref[...], w_ref[0], preferred_element_type=jnp.float32
    ).astype(hw_ref.dtype)


def _project_pallas(h_p, w_p, tmh):
    """h_p: (N_sp, Fin), w_p: (R, Fin, F_pad) -> (R, N_sp, F_pad)."""
    N_sp, Fin = h_p.shape
    R, _, F_pad = w_p.shape
    return pl.pallas_call(
        _hw_kernel,
        out_shape=jax.ShapeDtypeStruct((R, N_sp, F_pad), h_p.dtype),
        grid_spec=pltpu.PrefetchScalarGridSpec(
            num_scalar_prefetch=0,
            grid=(R, N_sp // tmh),
            in_specs=[
                pl.BlockSpec((tmh, Fin), lambda r, t: (t, 0)),
                pl.BlockSpec((1, Fin, F_pad), lambda r, t: (r, 0, 0)),
            ],
            out_specs=pl.BlockSpec((1, tmh, F_pad), lambda r, t: (r, t, 0)),
        ),
        compiler_params=pltpu.CompilerParams(
            dimension_semantics=("parallel", "parallel"),
        ),
    )(h_p, w_p)


# ----------------------------------------------------------------------------
# Kernel 2 (hot path): blocked matmul  out = act( Af @ HW_flat )
# ----------------------------------------------------------------------------
def _agg_kernel(mask_ref, a_ref, hw_ref, out_ref, *, activation):
    """Grid = (dst tiles [parallel], Fout tiles [parallel], K tiles [reduction]).

    mask_ref: (n_m, n_k) int32 in SMEM (scalar prefetch) -- nonzero-block table
    a_ref   : (TM, TK)  bf16 adjacency tile, layout (dst, (rel, src))
    hw_ref  : (TK, TF)  bf16 projected-feature tile
    out_ref : (TM, TF)  f32 output tile, resident across the reduction axis
    """
    i = pl.program_id(0)
    k = pl.program_id(2)

    @pl.when(k == 0)
    def _():
        out_ref[...] = jnp.zeros_like(out_ref)

    # Skip MXU work for all-zero adjacency blocks (graph sparsity).
    @pl.when(mask_ref[i, k] != 0)
    def _():
        out_ref[...] += jnp.dot(
            a_ref[...], hw_ref[...], preferred_element_type=jnp.float32
        )

    @pl.when(k == pl.num_programs(2) - 1)
    def _():
        h = out_ref[...]
        if activation == "leaky_relu":
            # F.leaky_relu default negative_slope = 0.01
            h = jnp.where(h >= 0, h, 0.01 * h)
        elif activation == "tanh":
            h = jnp.tanh(h)
        out_ref[...] = h


def rgcn_layer_pallas(adj, h, weight, activation, *, tm=512, tk=1024, tf=256,
                      compute_dtype=jnp.bfloat16):
    """adj: (R, N, N) f32, h: (N, Fin) f32, weight: (R, Fin, Fout) f32."""
    R, N, _ = adj.shape
    Fin = h.shape[1]
    Fout = weight.shape[2]
    cdt = compute_dtype

    # Tile sizes: capped defaults (512x1024 bf16 A tiles, 256-wide Fout tiles)
    # fit comfortably inside v7x's 64 MiB VMEM while staying near the HBM
    # roofline on v5e/v6e; small problems collapse to a single tile.
    TF = min(tf, _round_up(Fout, 128))          # lane-dense output tile
    F_pad = _round_up(Fout, TF)
    TM = min(tm, _round_up(N, 8))               # dst-row tile
    M_pad = _round_up(N, TM)
    TMH = min(512, _round_up(N, 8))             # row tile for the projection
    N_sp = _round_up(N, TMH)                    # per-relation padded src count
    K = R * N_sp                                # fused (relation, src) contraction
    TK = min(tk, _round_up(K, 128))
    K_pad = _round_up(K, TK)

    # bf16 inputs, zero-padded to tile multiples (zeros contribute nothing).
    h_p = jnp.zeros((N_sp, Fin), cdt).at[:N, :].set(h.astype(cdt))
    w_p = jnp.zeros((R, Fin, F_pad), cdt).at[:, :, :Fout].set(weight.astype(cdt))

    # Prologue: HW[r] = H @ W_r, computed ONCE (hoisted out of the dst-tile loop).
    hw = _project_pallas(h_p, w_p, TMH)                     # (R, N_sp, F_pad)
    hw_flat = hw.reshape(R * N_sp, F_pad)
    if K_pad > K:
        hw_flat = jnp.pad(hw_flat, ((0, K_pad - K), (0, 0)))

    # Adjacency laid out as (dst, (rel, src)) so the relation sum becomes part of
    # a single blocked matmul contraction (no per-relation grid steps).
    a_p = jnp.zeros((R, M_pad, N_sp), cdt).at[:, :N, :N].set(adj.astype(cdt))
    af = jnp.transpose(a_p, (1, 0, 2)).reshape(M_pad, R * N_sp)
    if K_pad > K:
        af = jnp.pad(af, ((0, 0), (0, K_pad - K)))

    n_m, n_f, n_k = M_pad // TM, F_pad // TF, K_pad // TK

    # Per-(dst tile, contraction tile) nonzero-block mask -> skip empty blocks.
    mask = jnp.any(af.reshape(n_m, TM, n_k, TK) != 0, axis=(1, 3)).astype(jnp.int32)
    # TODO(synk): full block-sparse path that also skips the DMA of empty A tiles
    # (prefetch-driven index_map enumerating only nonzero blocks).

    itm = jnp.dtype(cdt).itemsize
    cost = pl.CostEstimate(
        flops=2 * M_pad * K_pad * F_pad,
        transcendentals=(M_pad * F_pad) if activation == "tanh" else 0,
        bytes_accessed=M_pad * K_pad * itm + K_pad * F_pad * itm
        + M_pad * F_pad * 4 + n_m * n_k * 4,
    )

    out_padded = pl.pallas_call(
        partial(_agg_kernel, activation=activation),
        out_shape=jax.ShapeDtypeStruct((M_pad, F_pad), jnp.float32),
        grid_spec=pltpu.PrefetchScalarGridSpec(
            num_scalar_prefetch=1,
            grid=(n_m, n_f, n_k),                 # reduction axis last
            in_specs=[
                pl.BlockSpec((TM, TK), lambda i, j, k, msk: (i, k)),
                pl.BlockSpec((TK, TF), lambda i, j, k, msk: (k, j)),
            ],
            out_specs=pl.BlockSpec((TM, TF), lambda i, j, k, msk: (i, j)),
        ),
        compiler_params=pltpu.CompilerParams(
            dimension_semantics=("parallel", "parallel", "arbitrary"),
            vmem_limit_bytes=48 * 1024 * 1024,    # headroom below v7x's 64 MiB
        ),
        cost_estimate=cost,
    )(mask, af, hw_flat)

    return out_padded[:N, :Fout]


# ----------------------------------------------------------------------------
# Glue: basis decomposition, frozen concat, full model forward
# ----------------------------------------------------------------------------
def compose_weight(weight, w_comp, num_rels):
    """Mirrors the torch .view / matmul / .view basis-decomposition trick."""
    if w_comp is None:
        return weight
    nb, it, of = weight.shape
    w = weight.reshape(it, nb, of)          # torch .view
    w = jnp.matmul(w_comp, w)               # (it, num_rels, of) via broadcast bmm
    return w.reshape(num_rels, it, of)      # torch .view


def rgcn_forward(features, adj, layer_params, freeze, num_rels):
    """layer_params: list of (weight, w_comp, activation, concat_frozen)."""
    frozen = features[:, :freeze]
    h = features
    for weight, w_comp, act, concat_frozen in layer_params:
        w = compose_weight(weight, w_comp, num_rels)
        h = rgcn_layer_pallas(adj, h, w, act)
        if concat_frozen and freeze > 0:
            h = jnp.concatenate([frozen, h], axis=1)
    return h


# Pure-JAX reference (matches the kernel's bf16 input quantization so the
# check stays tight; only f32 accumulation order / tanh ULPs differ).
def rgcn_forward_ref(features, adj, layer_params, freeze, num_rels,
                     compute_dtype=jnp.bfloat16):
    frozen = features[:, :freeze]
    h = features
    adj_c = adj.astype(compute_dtype)
    for weight, w_comp, act, concat_frozen in layer_params:
        w = compose_weight(weight, w_comp, num_rels)
        hb = h.astype(compute_dtype)
        wb = w.astype(compute_dtype)
        hw = jnp.einsum("uf,rfo->ruo", hb, wb,
                        preferred_element_type=jnp.float32).astype(compute_dtype)
        h_new = jnp.einsum("rvu,ruo->vo", adj_c, hw,
                           preferred_element_type=jnp.float32)
        if act == "leaky_relu":
            h_new = jnp.where(h_new >= 0, h_new, 0.01 * h_new)
        elif act == "tanh":
            h_new = jnp.tanh(h_new)
        h = h_new
        if concat_frozen and freeze > 0:
            h = jnp.concatenate([frozen, h], axis=1)
    return h


# ----------------------------------------------------------------------------
# Deterministic parameter / graph construction
# ----------------------------------------------------------------------------
def xavier_normal(key, shape, gain=1.414):
    # torch xavier for >2D tensors: fan_in = shape[1]*prod(shape[2:]),
    #                               fan_out = shape[0]*prod(shape[2:])
    if len(shape) > 2:
        rf = 1
        for s in shape[2:]:
            rf *= s
        fan_in, fan_out = shape[1] * rf, shape[0] * rf
    else:
        fan_in, fan_out = shape[1], shape[0]
    std = gain * (2.0 / (fan_in + fan_out)) ** 0.5
    return std * jax.random.normal(key, shape, dtype=jnp.float32)


if __name__ == "__main__":
    key = jax.random.PRNGKey(0)

    # Small, module-consistent shapes
    N, E = 16, 48                     # nodes, edges
    in_dim, h_dim, out_dim = 8, 16, 4
    num_rels, num_bases = 3, 2        # exercises w_comp basis decomposition
    num_hidden_layers = 1
    freeze = 2                        # exercises frozen-feature concat
    # feat_drop = 0.0  -> dropout is identity (inference semantics)

    k_feat, k_src, k_dst, k_rel, *k_params = jax.random.split(key, 5 + 6)

    features = jax.random.normal(k_feat, (N, in_dim), dtype=jnp.float32)

    # Synthetic relational graph: edges (src -> dst) with relation type + norm
    src = jax.random.randint(k_src, (E,), 0, N)
    dst = jax.random.randint(k_dst, (E,), 0, N)
    rel = jax.random.randint(k_rel, (E,), 0, num_rels)
    in_deg = jnp.zeros((N,), jnp.float32).at[dst].add(1.0)
    norm = 1.0 / jnp.maximum(in_deg, 1.0)[dst]      # per-edge norm = 1/in_deg(dst)
    adj = jnp.zeros((num_rels, N, N), jnp.float32).at[rel, dst, src].add(norm)

    # Layer configs: (in_feat, out_feat, freeze_in, freeze_out, activation)
    layer_cfg = [(in_dim, h_dim, 0, freeze, "leaky_relu")]
    layer_cfg += [(h_dim, h_dim, freeze, freeze, "leaky_relu")] * num_hidden_layers
    layer_cfg += [(h_dim, out_dim, freeze, 0, "tanh")]

    layer_params = []
    for li, (fi, fo, fz_in, fz_out, act) in enumerate(layer_cfg):
        kw, kc = jax.random.split(k_params[li])
        w = xavier_normal(kw, (num_bases, fi + fz_in, fo))
        w_comp = (
            xavier_normal(kc, (num_rels, num_bases))
            if num_bases < num_rels else None
        )
        layer_params.append((w, w_comp, act, fz_out > 0))

    out = rgcn_forward(features, adj, layer_params, freeze, num_rels)
    out = jax.block_until_ready(out)

    ref = rgcn_forward_ref(features, adj, layer_params, freeze, num_rels)
    assert out.shape == (N, out_dim)
    assert jnp.allclose(out, ref, rtol=2e-2, atol=2e-2), "mismatch vs reference"

    print("KERNEL_OK")
</pallas_src>

<mosaic_0001>
module attributes {stable_mosaic.version = 11 : i64} {
  func.func @_hw_kernel(%arg0: i32, %arg1: i32, %arg2: memref<16x8xbf16, #tpu.memory_space<vmem>>, %arg3: memref<1x8x128xbf16, #tpu.memory_space<vmem>>, %arg4: memref<1x16x128xbf16, #tpu.memory_space<vmem>>) attributes {dimension_semantics = [#tpu.dimension_semantics<parallel>, #tpu.dimension_semantics<parallel>], iteration_bounds = array<i64: 3, 1>, scalar_prefetch = 0 : i64, scratch_operands = 0 : i64, tpu.core_type = #tpu.core_type<tc>, window_params = [{transform_indices = @transform_0, window_bounds = array<i64: 16, 8>}, {transform_indices = @transform_1, window_bounds = array<i64: 1, 8, 128>}, {transform_indices = @transform_2, window_bounds = array<i64: 1, 16, 128>}]} {
    %c0 = arith.constant 0 : index
    %c0_0 = arith.constant 0 : index
    %0 = vector.load %arg2[%c0, %c0_0] : memref<16x8xbf16, #tpu.memory_space<vmem>>, vector<16x8xbf16>
    %c0_1 = arith.constant 0 : index
    %c0_2 = arith.constant 0 : index
    %c0_3 = arith.constant 0 : index
    %1 = vector.load %arg3[%c0_1, %c0_2, %c0_3] : memref<1x8x128xbf16, #tpu.memory_space<vmem>>, vector<1x8x128xbf16>
    %2 = vector.shape_cast %1 : vector<1x8x128xbf16> to vector<8x128xbf16>
    %cst = arith.constant dense<0.000000e+00> : vector<16x128xf32>
    %3 = tpu.matmul %0, %2, %cst {dimension_numbers = #tpu.dot_dimension_numbers<[1], [0], [0], [1], [0, 0, 1, 1], [], []>} : vector<16x8xbf16>, vector<8x128xbf16>, vector<16x128xf32> -> vector<16x128xf32>
    %4 = arith.truncf %3 : vector<16x128xf32> to vector<16x128xbf16>
    %c0_4 = arith.constant 0 : index
    %c0_5 = arith.constant 0 : index
    %c0_6 = arith.constant 0 : index
    %5 = vector.load %arg4[%c0_4, %c0_5, %c0_6] : memref<1x16x128xbf16, #tpu.memory_space<vmem>>, vector<1x16x128xbf16>
    %6 = vector.shape_cast %5 : vector<1x16x128xbf16> to vector<16x128xbf16>
    %7 = vector.shape_cast %4 : vector<16x128xbf16> to vector<1x16x128xbf16>
    tpu.vector_store %arg4[%c0_4, %c0_5, %c0_6], %7 {strides = array<i32>} : memref<1x16x128xbf16, #tpu.memory_space<vmem>>, vector<1x16x128xbf16>,
    return
  }
  func.func @transform_0(%arg0: i32, %arg1: i32) -> (i32, i32) {
    %c0_i32 = arith.constant 0 : i32
    %c0_i32_0 = arith.constant 0 : i32
    return %arg1, %c0_i32 : i32, i32
  }
  func.func @transform_1(%arg0: i32, %arg1: i32) -> (i32, i32, i32) {
    %c0_i32 = arith.constant 0 : i32
    %c0_i32_0 = arith.constant 0 : i32
    %c0_i32_1 = arith.constant 0 : i32
    return %arg0, %c0_i32, %c0_i32_0 : i32, i32, i32
  }
  func.func @transform_2(%arg0: i32, %arg1: i32) -> (i32, i32, i32) {
    %c0_i32 = arith.constant 0 : i32
    %c0_i32_0 = arith.constant 0 : i32
    return %arg0, %arg1, %c0_i32 : i32, i32, i32
  }
}

</mosaic_0001>

<llo_original>
// kernel: tpu_custom_call.1
$region0: #{tpu_custom_call.1}
  #allocation0 [shape = 'u32[]', space=smem, size = 0x4, offset = 0x4, fixed_abs, tag = 'smem constant byte address 0x4 - core index']
  #allocation1 [shape = 'u32[144,128]{1,0:T(1,128)}', space=vmem, size = 0x12000, scoped, tag = 'internal scratch']
  %s0 = inlined_call_operand.vmem [shape: bf16[16,8], index: 0, kind: input, shape index: {}]
  %s1 = inlined_call_operand.vmem [shape: bf16[3,8,128], index: 1, kind: input, shape index: {}]
  %s2 = inlined_call_operand.hbm [shape: bf16[3,16,128], index: 2, kind: output, shape index: {}]
  %s3 = sld [smem:[#allocation0]]
  $region41: #{tpu_custom_call.1} parent=0
    _
  %s5 = ssub.s32 1, %s3
  %s6 = scalar_select 0, %s5, %s3
  $region1: #{tpu_custom_call.1} parent=0
    #allocation2 [shape = 'u8[8192]{0}', space=vmem, size = 0x2000, scoped, tag = 'output window, operand 0']
    #allocation3 [shape = 's32[2]{0}', space=sflag, size = 0x8, scoped, tag = 'scoped memory for tpu_custom_call.1']
    %7 = vsyncpa [#allocation3], 0
    %s8 = scalar_lea.sflag [#allocation3], 1
    %9 = vsyncpa %s8, 0
    loop: start=0, step=1, limit=5
    $region2: #{tpu_custom_call.1} parent=1 // loop_pre_header
      _
    $region3: #{tpu_custom_call.1} parent=1 // loop_header
      %s11 = sphi 0, %s15
      %p12 = scmp.ge.s32.totalorder %s11, 5
      %s18 = sphi 0, %s30
      %s19 = sphi 0, %s26
      %s20 = sphi 0, %s18
      %s21 = sphi 0, %s19
      %s22 = sphi 0, %s20
      %s23 = sphi 0, %s21
      %s33 = sphi 0, %s35
      %s36 = sphi 0, %s33
      %s37 = sphi 0, %s36
      %s53 = sphi 0, %s37
      %s59 = sphi 0, %s61
      %s62 = sphi 0, %s59
      %s63 = sphi 0, %s62
      %s79 = sphi 0, %s63
      %s87 = sphi 0, %s89
      %s90 = sphi 0, %s87
      %s91 = sphi 0, %s90
      %s107 = sphi 0, %s91
    $region4: #{tpu_custom_call.1} parent=1 // loop_header_branch
      %14 = sbr.rel (%p12) target = $region8
    $region5: #{tpu_custom_call.1} parent=1 // loop_body
      %s16 = ssub.s32 %s11, 1
      %s17 = ssub.s32 %s11, 2
      %s24 = sadd.s32 1, %s19
      %p25 = scmp.ge.s32.totalorder %s24, 1
      %s26 = scalar_select %p25, 0, %s24
      %s27 = sadd.s32 1, %s18
      %s28 = scalar_select %p25, %s27, %s18
      %p29 = scmp.ge.s32.totalorder %s28, 3
      %s30 = scalar_select %p29, 0, %s28
      %s31 = ssub.s32 %s19, %s26
      %p32 = scmp.eq.s32.totalorder %s31, 0
      %s34 = sadd.s32 %s33, 1
      %s35 = scalar_select %p32, %s33, %s34
      %p38 = pneg %p32
      %p39 = scmp.eq.s32.totalorder %s11, 2
      %p40 = por %p38, %p39
      %p41 = scmp.ne.s32.totalorder %s33, %s36
      %p42 = scmp.eq.s32.totalorder %s11, 0
      %p43 = por %p41, %p42
      %p44 = scmp.ne.s32.totalorder %s33, %s36
      %p45 = scmp.eq.s32.totalorder %s16, 2
      %p46 = por %p44, %p45
      %p47 = scmp.ne.s32.totalorder %s36, %s37
      %p48 = scmp.eq.s32.totalorder %s16, 0
      %p49 = por %p47, %p48
      %p50 = scmp.ne.s32.totalorder %s36, %s37
      %p51 = scmp.eq.s32.totalorder %s17, 2
      %p52 = por %p50, %p51
      %p54 = scmp.ne.s32.totalorder %s37, %s53
      %p55 = scmp.eq.s32.totalorder %s17, 0
      %p56 = por %p54, %p55
      %s57 = ssub.s32 %s18, %s30
      %p58 = scmp.eq.s32.totalorder %s57, 0
      %s60 = sadd.s32 %s59, 1
      %s61 = scalar_select %p58, %s59, %s60
      %p64 = pneg %p58
      %p65 = scmp.eq.s32.totalorder %s11, 2
      %p66 = por %p64, %p65
      %p67 = scmp.ne.s32.totalorder %s59, %s62
      %p68 = scmp.eq.s32.totalorder %s11, 0
      %p69 = por %p67, %p68
      %p70 = scmp.ne.s32.totalorder %s59, %s62
      %p71 = scmp.eq.s32.totalorder %s16, 2
      %p72 = por %p70, %p71
      %p73 = scmp.ne.s32.totalorder %s62, %s63
      %p74 = scmp.eq.s32.totalorder %s16, 0
      %p75 = por %p73, %p74
      %p76 = scmp.ne.s32.totalorder %s62, %s63
      %p77 = scmp.eq.s32.totalorder %s17, 2
      %p78 = por %p76, %p77
      %p80 = scmp.ne.s32.totalorder %s63, %s79
      %p81 = scmp.eq.s32.totalorder %s17, 0
      %p82 = por %p80, %p81
      %s83 = ssub.s32 %s18, %s30
      %s84 = ssub.s32 %s19, %s26
      %s85 = sor.u32 %s83, %s84
      %p86 = scmp.eq.s32.totalorder %s85, 0
      %s88 = sadd.s32 %s87, 1
      %s89 = scalar_select %p86, %s87, %s88
      %p92 = pneg %p86
      %p93 = scmp.eq.s32.totalorder %s11, 2
      %p94 = por %p92, %p93
      %p95 = scmp.ne.s32.totalorder %s87, %s90
      %p96 = scmp.eq.s32.totalorder %s11, 0
      %p97 = por %p95, %p96
      %p98 = scmp.ne.s32.totalorder %s87, %s90
      %p99 = scmp.eq.s32.totalorder %s16, 2
      %p100 = por %p98, %p99
      %p101 = scmp.ne.s32.totalorder %s90, %s91
      %p102 = scmp.eq.s32.totalorder %s16, 0
      %p103 = por %p101, %p102
      %p104 = scmp.ne.s32.totalorder %s90, %s91
      %p105 = scmp.eq.s32.totalorder %s17, 2
      %p106 = por %p104, %p105
      %p108 = scmp.ne.s32.totalorder %s91, %s107
      %p109 = scmp.eq.s32.totalorder %s17, 0
      %p110 = por %p108, %p109
      %p111 = scmp.le.s32.totalorder 1, %s11
      %p112 = scmp.lt.s32.totalorder %s11, 4
      %p113 = pnand %p111, %p112
      %p114 = pneg %p113
      // Predicated region
      $region9: #{tpu_custom_call.1} parent=5 // pred_check
        _
      $region10: #{tpu_custom_call.1} parent=5 // pred_check_branch
        %116 = sbr.rel (%p113) target = $region12
      $region11: #{tpu_custom_call.1} parent=5 // pred_region
        %s117 = ssub.s32 %s11, 1
        // Predicated region
        $region13: #{tpu_custom_call.1} parent=11 // pred_check
          %p118 = pneg %p49
        $region14: #{tpu_custom_call.1} parent=11 // pred_check_branch
          %120 = sbr.rel (%p118) target = $region16
        $region15: #{tpu_custom_call.1} parent=11 // pred_region
          %s121 = smul.u32 2, %s21
          %p122 = scmp.lt.s32.totalorder %s121, 1
          %s123 = scalar_select %p122, %s121, 1
          %s124 = smul.addr %s123, 4
          %s125 = scalar_lea.vmem %s0, %s124
          %s126 = smul.u32 2, %s21
        $region16: #{tpu_custom_call.1} parent=11 // pred_fallthru
          _
      $region12: #{tpu_custom_call.1} parent=5 // pred_fallthru
        _
      %p127 = scmp.lt.s32.totalorder %s11, 3
      // Predicated region
      $region17: #{tpu_custom_call.1} parent=5 // pred_check
        %p128 = pneg %p127
      $region18: #{tpu_custom_call.1} parent=5 // pred_check_branch
        %130 = sbr.rel (%p128) target = $region20
      $region19: #{tpu_custom_call.1} parent=5 // pred_region
        // Predicated region
        $region21: #{tpu_custom_call.1} parent=19 // pred_check
          %p131 = pneg %p69
        $region22: #{tpu_custom_call.1} parent=19 // pred_check_branch
          %133 = sbr.rel (%p131) target = $region24
        $region23: #{tpu_custom_call.1} parent=19 // pred_region
          %p134 = scmp.lt.s32.totalorder %s18, 2
          %s135 = scalar_select %p134, %s18, 2
          %s136 = smul.addr %s135, 4
          %s137 = scalar_lea.vmem %s1, %s136
        $region24: #{tpu_custom_call.1} parent=19 // pred_fallthru
          _
      $region20: #{tpu_custom_call.1} parent=5 // pred_fallthru
        _
      %p138 = scmp.le.s32.totalorder 1, %s11
      %p139 = scmp.lt.s32.totalorder %s11, 4
      %p140 = pnand %p138, %p139
      %p141 = pneg %p140
      // Predicated region
      $region25: #{tpu_custom_call.1} parent=5 // pred_check
        _
      $region26: #{tpu_custom_call.1} parent=5 // pred_check_branch
        %143 = sbr.rel (%p140) target = $region28
      $region27: #{tpu_custom_call.1} parent=5 // pred_region
        %s144 = ssub.s32 %s11, 1
        %s145 = smul.u32 2, %s21
        %p146 = scmp.lt.s32.totalorder %s145, 1
        %s147 = scalar_select %p146, %s145, 1
        %s148 = smul.addr %s147, 4
        %s149 = scalar_lea.vmem %s0, %s148
        %p150 = pneg %p49
        %p151 = pneg %p46
        %p152 = scmp.lt.s32.totalorder %s20, 2
        %s153 = scalar_select %p152, %s20, 2
        %s154 = smul.addr %s153, 4
        %s155 = scalar_lea.vmem %s1, %s154
        %p156 = pneg %p75
        %p157 = pneg %p72
        %p158 = pneg %p103
        %p159 = pneg %p100
        %s160 = sand.u32 %s90, 1
        %s161 = scalar_lea.sflag [#allocation3], %s160
        %s162 = sand.u32 %s90, 1
        %s163 = smul.addr %s162, 8
        %s164 = scalar_lea.vmem [#allocation2], %s163
        %s165 = smul.u32 2, %s21
        %p166 = scmp.lt.s32.totalorder %s165, 1
        %s167 = scalar_select %p166, %s165, 1
        %s168 = smul.addr %s167, 4
        %s169 = scalar_lea.vmem %s0, %s168
        %s170 = smul.u32 2, %s21
        %p171 = scmp.lt.s32.totalorder %s20, 2
        %s172 = scalar_select %p171, %s20, 2
        %s173 = smul.addr %s172, 4
        %s174 = scalar_lea.vmem %s1, %s173
        %s175 = smul.u32 2, %s21
        %v177 = vld [vmem:[%s169] sm:$0xf]
        %v178 = vld [vmem:[%s169 + $0x4] sm:$0xf]
        %v179 = vld [vmem:[%s174] sm:$0xf]
        %v182 = vunpack.c.l.b16 %v177
        %v183 = vunpack.c.l.b16 %v178
        %v184 = vpack.c.b16 %v183, %v182
        %vm185 = vcmask 64512
        %v187 = vsel %vm185, %v184, 0
        %vm189 = vcmask 1043456
        %v191 = vsel %vm189, %v179, 0
        %193 = vmatprep.subr.bf16.mxu0 0
        %194 = vmatpush1.bf16.msra.mxu0 %v191
        %195 = vmatprep.subr.bf16.mxu0 0
        %196 = vmatpush1.bf16.msra.mxu0 0
        %197 = vmatprep.subr.bf16.mxu0 0
        %198 = vmatpush1.bf16.msra.mxu0 0
        %199 = vmatprep.subr.bf16.mxu0 0
        %200 = vmatpush1.bf16.msra.mxu0 0
        %201 = vmatprep.subr.bf16.mxu0 0
        %202 = vmatpush1.bf16.msra.mxu0 0
        %203 = vmatprep.subr.bf16.mxu0 0
        %204 = vmatpush1.bf16.msra.mxu0 0
        %205 = vmatprep.subr.bf16.mxu0 0
        %206 = vmatpush1.bf16.msra.mxu0 0
        %207 = vmatprep.subr.bf16.mxu0 0
        %208 = vmatpush1.bf16.msra.mxu0 0
        %209 = vmatprep.subr.bf16.mxu0 0
        %210 = vmatpush1.bf16.msra.mxu0 0
        %211 = vmatprep.subr.bf16.mxu0 0
        %212 = vmatpush1.bf16.msra.mxu0 0
        %213 = vmatprep.subr.bf16.mxu0 0
        %214 = vmatpush1.bf16.msra.mxu0 0
        %215 = vmatprep.subr.bf16.mxu0 0
        %216 = vmatpush1.bf16.msra.mxu0 0
        %217 = vmatprep.subr.bf16.mxu0 0
        %218 = vmatpush1.bf16.msra.mxu0 0
        %219 = vmatprep.subr.bf16.mxu0 0
        %220 = vmatpush1.bf16.msra.mxu0 0
        %221 = vmatprep.subr.bf16.mxu0 0
        %222 = vmatpush1.bf16.msra.mxu0 0
        %223 = vmatprep.subr.bf16.mxu0 0
        %224 = vmatpush1.bf16.msra.mxu0 0
        %225 = vmatprep.mubr.bf16.mxu0 0
        %226 = vmatmul.mubr.bf16.gmra.mrb[0].mxu0 %v187
        %v227 = vpop.f32.mrb[0].mxu0
        %v228 = vadd.f32 0.0, %v227
        %v229 = vpop.f32.mrb[0].mxu0
        %v230 = vpop.f32.mrb[0].mxu0
        %v231 = vadd.f32 0.0, %v230
        %v232 = vpop.f32.mrb[0].mxu0
        %233 = vdwg.mxu0
        %v234 = vpack.c.bf16 %v231, %v228
        %v236 = vunpack.c.l.b16 %v234
        %v237 = vunpack.c.h.b16 %v234
        %v238 = vpack.c.b16 %v236, %v236
        %v239 = vpack.c.b16 %v237, %v237
        %242 = vst [vmem:[%s164] sm:$0xf] %v238
        %243 = vst [vmem:[%s164 + $0x4] sm:$0xf] %v239
        %s244 = sand.u32 %s90, 1
        %s245 = scalar_lea.sflag [#allocation3], %s244
        %s246 = sand.u32 %s90, 1
        %s247 = smul.addr %s246, 8
        %s248 = scalar_lea.vmem [#allocation2], %s247
        // Predicated region
        $region29: #{tpu_custom_call.1} parent=27 // pred_check
          %p249 = pneg %p100
        $region30: #{tpu_custom_call.1} parent=27 // pred_check_branch
          %251 = sbr.rel (%p249) target = $region32
        $region31: #{tpu_custom_call.1} parent=27 // pred_region
          %s252 = smul.u32 2, %s21
          %s254 = ssub.s32 128, 128
          %255 = vsyncadd %s245, %s254
          %s256 = smul.addr %s20, 2
          %s257 = sadd.s32 %s252, %s256
          %s258 = smul.addr %s257, 64
          %s259 = scalar_lea.hbm %s2, %s258
          %s260 = sshll.u32 %s248, 4
          %s261 = int_to_ptr.vmem [resolvable:$true] %s260
          %266 = dma.vmem_to_hbm [thread:$0]  %s261, 128, %s259, %s245, 64, 64, 4
        $region32: #{tpu_custom_call.1} parent=27 // pred_fallthru
          _
      $region28: #{tpu_custom_call.1} parent=5 // pred_fallthru
        _
      %p267 = scmp.le.s32.totalorder 2, %s11
      // Predicated region
      $region33: #{tpu_custom_call.1} parent=5 // pred_check
        %p268 = pneg %p267
      $region34: #{tpu_custom_call.1} parent=5 // pred_check_branch
        %270 = sbr.rel (%p268) target = $region36
      $region35: #{tpu_custom_call.1} parent=5 // pred_region
        %s271 = ssub.s32 %s11, 2
        // Predicated region
        $region37: #{tpu_custom_call.1} parent=35 // pred_check
          %p272 = pneg %p106
        $region38: #{tpu_custom_call.1} parent=35 // pred_check_branch
          %274 = sbr.rel (%p272) target = $region40
        $region39: #{tpu_custom_call.1} parent=35 // pred_region
          %s275 = sand.u32 %s91, 1
          %s276 = scalar_lea.sflag [#allocation3], %s275
          %s277 = sand.u32 %s91, 1
          %s278 = smul.addr %s277, 8
          %s279 = scalar_lea.vmem [#allocation2], %s278
          %280 = dma.done %s276, 128
        $region40: #{tpu_custom_call.1} parent=35 // pred_fallthru
          _
      $region36: #{tpu_custom_call.1} parent=5 // pred_fallthru
        _
    $region6: #{tpu_custom_call.1} parent=1 // loop_footer
      %s15 = sadd.s32 1, %s11
    $region7: #{tpu_custom_call.1} parent=1 // loop_footer_branch
      %10 = sbr.rel target = $region3
    $region8: #{tpu_custom_call.1} parent=1 // loop_exit
      _
    %281 = vsyncpa [#allocation3], 1
    %s282 = scalar_lea.sflag [#allocation3], 1
    %283 = vsyncpa %s282, 1

</llo_original>
